<compile_context>
chip_gen: v6e
topology: v6e:2x2x1
jax: 0.10.0
libtpu: 0.0.40
codegen_flags: <defaults>
</compile_context>

<pallas_src>
import functools

import jax
import jax.numpy as jnp
import numpy as np
from jax.experimental import pallas as pl
from jax.experimental.pallas import tpu as pltpu


def _round_up(a, b):
    return ((a + b - 1) // b) * b


def ace_linear_kernel(x_ref, w_org_ref, b_ref, w_down_ref, w_up_ref, o_ref):
    """One (tm, tn) output tile of the fused (org linear + LoRA) forward.

    x_ref:      (tm, K)  bf16
    w_org_ref:  (K, tn)  bf16
    b_ref:      (1, tn)  f32
    w_down_ref: (K, R)   bf16
    w_up_ref:   (R, tn)  bf16   (multiplier*scale already folded in)
    o_ref:      (tm, tn) f32
    """
    x = x_ref[...]
    # original Linear path: x @ W_org  (f32 accumulation on the MXU)
    acc = jnp.dot(x, w_org_ref[...], preferred_element_type=jnp.float32)
    # LoRA path: (x @ W_down) @ (scale * W_up)
    d = jnp.dot(x, w_down_ref[...], preferred_element_type=jnp.float32)       # (tm, R)
    acc = acc + jnp.dot(d.astype(w_up_ref.dtype), w_up_ref[...],
                        preferred_element_type=jnp.float32)                    # (tm, tn)
    # bias add in f32, single cast at the final store
    o_ref[...] = (acc + b_ref[...]).astype(o_ref.dtype)


@functools.partial(jax.jit, static_argnames=("multiplier", "scale", "tm", "tn"))
def ace_layer_forward(x, w_org, b_org, w_down, w_up, multiplier, scale, tm=256, tn=512):
    """x: (M, K); weights in PyTorch [out, in] convention. Returns (M, N) in x.dtype."""
    M, K = x.shape
    N = w_org.shape[0]
    R = w_down.shape[0]

    # --- tile selection (MXU-friendly, clamped to the actual problem) ---------------
    tm_eff = min(tm, _round_up(M, 16))          # multiple of 16 (bf16 sublane packing)
    tm_eff = max(16, _round_up(tm_eff, 16))
    if N <= tn:
        tn_eff = N                               # full-dim block (allowed even if <128)
    else:
        tn_eff = _round_up(tn, 128)              # lane-dense output tiles
    M_pad = _round_up(M, tm_eff)
    N_pad = _round_up(N, tn_eff)

    # --- glue (inside jit => fused, not a per-call HBM transpose) -------------------
    x_b = x.astype(jnp.bfloat16)
    if M_pad != M:
        x_b = jnp.pad(x_b, ((0, M_pad - M), (0, 0)))
    w_org_t = jnp.asarray(w_org).T.astype(jnp.bfloat16)                        # (K, N)
    w_down_t = jnp.asarray(w_down).T.astype(jnp.bfloat16)                      # (K, R)
    # fold multiplier * (alpha/rank) into the tiny (R, N) up-projection once
    w_up_t = (jnp.asarray(w_up).T * jnp.float32(multiplier * scale)).astype(jnp.bfloat16)
    b2 = jnp.asarray(b_org).reshape(1, N).astype(jnp.float32)
    if N_pad != N:
        w_org_t = jnp.pad(w_org_t, ((0, 0), (0, N_pad - N)))
        w_up_t = jnp.pad(w_up_t, ((0, 0), (0, N_pad - N)))
        b2 = jnp.pad(b2, ((0, 0), (0, N_pad - N)))

    grid = (M_pad // tm_eff, N_pad // tn_eff)

    # --- explicit VMEM budget: 2x double-buffered input blocks + output, with headroom
    est = 2 * (tm_eff * K * 2          # x tile (bf16)
               + K * tn_eff * 2        # w_org tile (bf16)
               + K * R * 2             # w_down (bf16)
               + R * tn_eff * 2        # w_up tile (bf16)
               + tn_eff * 4            # bias (f32)
               + tm_eff * tn_eff * 4)  # output tile (f32)
    vmem_limit = int(min(96 * 2**20, max(32 * 2**20, 3 * est)))

    out = pl.pallas_call(
        ace_linear_kernel,
        out_shape=jax.ShapeDtypeStruct((M_pad, N_pad), jnp.float32),
        grid_spec=pltpu.PrefetchScalarGridSpec(
            num_scalar_prefetch=0,
            grid=grid,
            in_specs=[
                pl.BlockSpec((tm_eff, K), lambda i, j: (i, 0)),     # activation row tile
                pl.BlockSpec((K, tn_eff), lambda i, j: (0, j)),     # org weight N-tile
                pl.BlockSpec((1, tn_eff), lambda i, j: (0, j)),     # bias N-tile
                pl.BlockSpec((K, R), lambda i, j: (0, 0)),          # lora_down (tiny, resident)
                pl.BlockSpec((R, tn_eff), lambda i, j: (0, j)),     # lora_up N-tile (pre-scaled)
            ],
            out_specs=pl.BlockSpec((tm_eff, tn_eff), lambda i, j: (i, j)),
        ),
        compiler_params=pltpu.CompilerParams(
            dimension_semantics=("parallel", "parallel"),
            vmem_limit_bytes=vmem_limit,
        ),
    )(x_b, w_org_t, b2, w_down_t, w_up_t)

    return out[:M, :N].astype(x.dtype)


def ace_layer_ref(x, w_org, b_org, w_down, w_up, multiplier, scale):
    org = x @ w_org.T + b_org
    lora = (x @ w_down.T) @ w_up.T
    return org + lora * multiplier * scale


if __name__ == "__main__":
    # Small shapes implied by the module: Linear(in=32, out=32), rank dim=4, alpha=1.
    batch, seq, in_dim, out_dim = 2, 8, 32, 32
    rank, alpha, multiplier = 4, 1, 1.0
    scale = alpha / rank                      # ACELayer: self.scale = alpha / self.dim
    M = batch * seq

    key = jax.random.PRNGKey(0)
    kx, ko, kb, kd, ku = jax.random.split(key, 5)

    x = jax.random.normal(kx, (M, in_dim), dtype=jnp.float32)

    # org nn.Linear params (deterministic synthetic init, PyTorch [out, in] layout)
    w_org = jax.random.normal(ko, (out_dim, in_dim), dtype=jnp.float32) * 0.05
    b_org = jax.random.normal(kb, (out_dim,), dtype=jnp.float32) * 0.05

    # lora_down: kaiming_uniform_(a=sqrt(5)) -> U(-1/sqrt(fan_in), 1/sqrt(fan_in))
    bound = 1.0 / np.sqrt(in_dim)
    w_down = jax.random.uniform(kd, (rank, in_dim), dtype=jnp.float32,
                                minval=-bound, maxval=bound)
    # Module __init__ zero-inits lora_up; use a small random weight here so the
    # LoRA path is numerically exercised (set to zeros to match __init__ exactly).
    w_up = jax.random.normal(ku, (out_dim, rank), dtype=jnp.float32) * 0.05

    out = ace_layer_forward(x, w_org, b_org, w_down, w_up, multiplier, scale)
    out = jax.block_until_ready(out)

    ref = ace_layer_ref(x, w_org, b_org, w_down, w_up, multiplier, scale)
    # bf16 inputs on the MXU (f32 accumulation): compare at bf16-level tolerance.
    np.testing.assert_allclose(np.asarray(out), np.asarray(ref), rtol=2e-2, atol=2e-2)

    print("KERNEL_OK")
</pallas_src>

<mosaic_0001>
module attributes {stable_mosaic.version = 11 : i64} {
  func.func @ace_linear_kernel(%arg0: i32, %arg1: i32, %arg2: memref<16x32xbf16, #tpu.memory_space<vmem>>, %arg3: memref<32x32xbf16, #tpu.memory_space<vmem>>, %arg4: memref<1x32xf32, #tpu.memory_space<vmem>>, %arg5: memref<32x4xbf16, #tpu.memory_space<vmem>>, %arg6: memref<4x32xbf16, #tpu.memory_space<vmem>>, %arg7: memref<16x32xf32, #tpu.memory_space<vmem>>) attributes {dimension_semantics = [#tpu.dimension_semantics<parallel>, #tpu.dimension_semantics<parallel>], iteration_bounds = array<i64: 1, 1>, scalar_prefetch = 0 : i64, scratch_operands = 0 : i64, tpu.core_type = #tpu.core_type<tc>, window_params = [{transform_indices = @transform_0, window_bounds = array<i64: 16, 32>}, {transform_indices = @transform_1, window_bounds = array<i64: 32, 32>}, {transform_indices = @transform_2, window_bounds = array<i64: 1, 32>}, {pipeline_mode = #tpu.pipeline_mode<synchronous>, transform_indices = @transform_3, window_bounds = array<i64: 32, 4>}, {transform_indices = @transform_4, window_bounds = array<i64: 4, 32>}, {transform_indices = @transform_5, window_bounds = array<i64: 16, 32>}]} {
    %c0 = arith.constant 0 : index
    %c0_0 = arith.constant 0 : index
    %0 = vector.load %arg2[%c0, %c0_0] : memref<16x32xbf16, #tpu.memory_space<vmem>>, vector<16x32xbf16>
    %c0_1 = arith.constant 0 : index
    %c0_2 = arith.constant 0 : index
    %1 = vector.load %arg3[%c0_1, %c0_2] : memref<32x32xbf16, #tpu.memory_space<vmem>>, vector<32x32xbf16>
    %cst = arith.constant dense<0.000000e+00> : vector<16x32xf32>
    %2 = tpu.matmul %0, %1, %cst {dimension_numbers = #tpu.dot_dimension_numbers<[1], [0], [0], [1], [0, 0, 1, 1], [], []>} : vector<16x32xbf16>, vector<32x32xbf16>, vector<16x32xf32> -> vector<16x32xf32>
    %c0_3 = arith.constant 0 : index
    %c0_4 = arith.constant 0 : index
    %3 = vector.load %arg5[%c0_3, %c0_4] : memref<32x4xbf16, #tpu.memory_space<vmem>>, vector<32x4xbf16>
    %cst_5 = arith.constant dense<0.000000e+00> : vector<16x4xf32>
    %4 = tpu.matmul %0, %3, %cst_5 {dimension_numbers = #tpu.dot_dimension_numbers<[1], [0], [0], [1], [0, 0, 1, 1], [], []>} : vector<16x32xbf16>, vector<32x4xbf16>, vector<16x4xf32> -> vector<16x4xf32>
    %5 = arith.truncf %4 : vector<16x4xf32> to vector<16x4xbf16>
    %c0_6 = arith.constant 0 : index
    %c0_7 = arith.constant 0 : index
    %6 = vector.load %arg6[%c0_6, %c0_7] : memref<4x32xbf16, #tpu.memory_space<vmem>>, vector<4x32xbf16>
    %cst_8 = arith.constant dense<0.000000e+00> : vector<16x32xf32>
    %7 = tpu.matmul %5, %6, %cst_8 {dimension_numbers = #tpu.dot_dimension_numbers<[1], [0], [0], [1], [0, 0, 1, 1], [], []>} : vector<16x4xbf16>, vector<4x32xbf16>, vector<16x32xf32> -> vector<16x32xf32>
    %8 = arith.addf %2, %7 : vector<16x32xf32>
    %c0_9 = arith.constant 0 : index
    %c0_10 = arith.constant 0 : index
    %9 = vector.load %arg4[%c0_9, %c0_10] : memref<1x32xf32, #tpu.memory_space<vmem>>, vector<1x32xf32>
    %10 = vector.broadcast %9 : vector<1x32xf32> to vector<16x32xf32>
    %11 = arith.addf %8, %10 : vector<16x32xf32>
    %c0_11 = arith.constant 0 : index
    %c0_12 = arith.constant 0 : index
    %12 = vector.load %arg7[%c0_11, %c0_12] : memref<16x32xf32, #tpu.memory_space<vmem>>, vector<16x32xf32>
    tpu.vector_store %arg7[%c0_11, %c0_12], %11 {strides = array<i32>} : memref<16x32xf32, #tpu.memory_space<vmem>>, vector<16x32xf32>,
    return
  }
  func.func @transform_0(%arg0: i32, %arg1: i32) -> (i32, i32) {
    %c0_i32 = arith.constant 0 : i32
    %c0_i32_0 = arith.constant 0 : i32
    return %arg0, %c0_i32 : i32, i32
  }
  func.func @transform_1(%arg0: i32, %arg1: i32) -> (i32, i32) {
    %c0_i32 = arith.constant 0 : i32
    %c0_i32_0 = arith.constant 0 : i32
    return %c0_i32, %arg1 : i32, i32
  }
  func.func @transform_2(%arg0: i32, %arg1: i32) -> (i32, i32) {
    %c0_i32 = arith.constant 0 : i32
    %c0_i32_0 = arith.constant 0 : i32
    return %c0_i32, %arg1 : i32, i32
  }
  func.func @transform_3(%arg0: i32, %arg1: i32) -> (i32, i32) {
    %c0_i32 = arith.constant 0 : i32
    %c0_i32_0 = arith.constant 0 : i32
    %c0_i32_1 = arith.constant 0 : i32
    return %c0_i32, %c0_i32_0 : i32, i32
  }
  func.func @transform_4(%arg0: i32, %arg1: i32) -> (i32, i32) {
    %c0_i32 = arith.constant 0 : i32
    %c0_i32_0 = arith.constant 0 : i32
    return %c0_i32, %arg1 : i32, i32
  }
  func.func @transform_5(%arg0: i32, %arg1: i32) -> (i32, i32) {
    %c0_i32 = arith.constant 0 : i32
    return %arg0, %arg1 : i32, i32
  }
}

</mosaic_0001>

<llo_original>
// kernel: ace_layer_forward.1
$region0: #{ace_layer_forward.1}
  #allocation0 [shape = 'u32[]', space=smem, size = 0x4, offset = 0x4, fixed_abs, tag = 'smem constant byte address 0x4 - core index']
  #allocation1 [shape = 'u32[144,128]{1,0:T(1,128)}', space=vmem, size = 0x12000, scoped, tag = 'internal scratch']
  %s0 = inlined_call_operand.vmem [shape: bf16[16,32], index: 0, kind: input, shape index: {}]
  %s1 = inlined_call_operand.vmem [shape: bf16[32,32], index: 1, kind: input, shape index: {}]
  %s2 = inlined_call_operand.vmem [shape: f32[1,32], index: 2, kind: input, shape index: {}]
  %s3 = inlined_call_operand.vmem [shape: bf16[32,4], index: 3, kind: input, shape index: {}]
  %s4 = inlined_call_operand.vmem [shape: bf16[4,32], index: 4, kind: input, shape index: {}]
  %s5 = inlined_call_operand.hbm [shape: f32[16,32], index: 5, kind: output, shape index: {}]
  %s6 = sld [smem:[#allocation0]]
  $region30: #{ace_layer_forward.1} parent=0
    _
  %s8 = ssub.s32 1, %s6
  %s9 = scalar_select 0, %s8, %s6
  $region1: #{ace_layer_forward.1} parent=0
    #allocation2 [shape = 'u8[8192]{0}', space=vmem, size = 0x2000, scoped, tag = 'output window, operand 0, single buffered']
    #allocation3 [shape = 's32[1]{0}', space=sflag, size = 0x4, scoped, tag = 'scoped memory for ace_layer_forward.1']
    %10 = vsyncpa [#allocation3], 0
    // Predicated region
    $region2: #{ace_layer_forward.1} parent=1 // pred_check
      _
    $region3: #{ace_layer_forward.1} parent=1 // pred_check_branch
      %12 = sbr.rel (0) target = $region5
    $region4: #{ace_layer_forward.1} parent=1 // pred_region
      _
    $region5: #{ace_layer_forward.1} parent=1 // pred_fallthru
      _
    // Predicated region
    $region6: #{ace_layer_forward.1} parent=1 // pred_check
      _
    $region7: #{ace_layer_forward.1} parent=1 // pred_check_branch
      %14 = sbr.rel (0) target = $region9
    $region8: #{ace_layer_forward.1} parent=1 // pred_region
      _
    $region9: #{ace_layer_forward.1} parent=1 // pred_fallthru
      _
    // Predicated region
    $region10: #{ace_layer_forward.1} parent=1 // pred_check
      _
    $region11: #{ace_layer_forward.1} parent=1 // pred_check_branch
      %16 = sbr.rel (0) target = $region13
    $region12: #{ace_layer_forward.1} parent=1 // pred_region
      _
    $region13: #{ace_layer_forward.1} parent=1 // pred_fallthru
      _
    // Predicated region
    $region14: #{ace_layer_forward.1} parent=1 // pred_check
      _
    $region15: #{ace_layer_forward.1} parent=1 // pred_check_branch
      %18 = sbr.rel (0) target = $region17
    $region16: #{ace_layer_forward.1} parent=1 // pred_region
      _
    $region17: #{ace_layer_forward.1} parent=1 // pred_fallthru
      _
    // Predicated region
    $region18: #{ace_layer_forward.1} parent=1 // pred_check
      _
    $region19: #{ace_layer_forward.1} parent=1 // pred_check_branch
      %20 = sbr.rel (0) target = $region21
    $region20: #{ace_layer_forward.1} parent=1 // pred_region
      _
    $region21: #{ace_layer_forward.1} parent=1 // pred_fallthru
      _
    %v22 = vld [vmem:[%s0] sm:$0xf]
    %v23 = vld [vmem:[%s0 + $0x4] sm:$0xf]
    %v24 = vld [vmem:[%s1] sm:$0xf]
    %v25 = vld [vmem:[%s1 + $0x4] sm:$0xf]
    %v26 = vld [vmem:[%s1 + $0x8] sm:$0xf]
    %v27 = vld [vmem:[%s1 + $0xc] sm:$0xf]
    %v28 = vld [vmem:[%s3] sm:$0xf]
    %v29 = vld [vmem:[%s3 + $0x4] sm:$0xf]
    %v30 = vld [vmem:[%s3 + $0x8] sm:$0xf]
    %v31 = vld [vmem:[%s3 + $0xc] sm:$0xf]
    %v34 = vunpack.c.l.b16 %v22
    %v35 = vunpack.c.l.b16 %v23
    %v36 = vpack.c.b16 %v35, %v34
    %v41 = vunpack.c.l.b16 %v28
    %v42 = vunpack.c.l.b16 %v29
    %v43 = vunpack.c.l.b16 %v30
    %v44 = vunpack.c.l.b16 %v31
    %v45 = vpack.c.b16 %v42, %v41
    %v46 = vpack.c.b16 %v44, %v43
    %vm49 = vcmask 261120
    %v51 = vsel %vm49, %v36, 0
    %53 = vmatprep.subr.bf16.mxu0 0
    %54 = vmatpush1.bf16.msra.mxu0 0
    %55 = vmatprep.subr.bf16.mxu0 0
    %56 = vmatpush1.bf16.msra.mxu0 0
    %57 = vmatprep.subr.bf16.mxu0 0
    %58 = vmatpush1.bf16.msra.mxu0 0
    %59 = vmatprep.subr.bf16.mxu0 0
    %60 = vmatpush1.bf16.msra.mxu0 0
    %61 = vmatprep.subr.bf16.mxu0 0
    %62 = vmatpush1.bf16.msra.mxu0 0
    %63 = vmatprep.subr.bf16.mxu0 0
    %64 = vmatpush1.bf16.msra.mxu0 0
    %65 = vmatprep.subr.bf16.mxu0 0
    %66 = vmatpush1.bf16.msra.mxu0 %v46
    %67 = vmatprep.subr.bf16.mxu0 0
    %68 = vmatpush1.bf16.msra.mxu0 %v45
    %69 = vmatprep.subr.bf16.mxu0 0
    %70 = vmatpush2.bf16.msra.mxu0 0
    %71 = vmatprep.subr.bf16.mxu0 0
    %72 = vmatpush2.bf16.msra.mxu0 0
    %73 = vmatprep.subr.bf16.mxu0 0
    %74 = vmatpush2.bf16.msra.mxu0 0
    %75 = vmatprep.subr.bf16.mxu0 0
    %76 = vmatpush2.bf16.msra.mxu0 0
    %77 = vmatprep.subr.bf16.mxu0 0
    %78 = vmatpush2.bf16.msra.mxu0 0
    %79 = vmatprep.subr.bf16.mxu0 0
    %80 = vmatpush2.bf16.msra.mxu0 0
    %81 = vmatprep.subr.bf16.mxu0 0
    %82 = vmatpush2.bf16.msra.mxu0 0
    %83 = vmatprep.subr.bf16.mxu0 0
    %84 = vmatpush2.bf16.msra.mxu0 0
    %85 = vmatprep.mubr.bf16.mxu0 0
    %86 = vmatmul.mubr.bf16.gmra.mxu0 %v51
    %v87 = vpop.f32.mrf.mxu0
    %v88 = vadd.f32 0.0, %v87
    %v89 = vpop.f32.mrf.mxu0
    %v90 = vpop.f32.mrf.mxu0
    %v91 = vadd.f32 0.0, %v90
    %v92 = vpop.f32.mrf.mxu0
    %93 = vdwg.mxu0
    %v94 = vpack.c.bf16 %v91, %v88
    %v95 = vld [vmem:[%s4] sm:$0x3]
    %vm96 = vcmask 31744
    %v98 = vsel %vm96, %v94, 0
    %vm100 = vcmask 1041408
    %v102 = vsel %vm100, %v95, 0
    %104 = vmatprep.subr.bf16.mxu0 0
    %105 = vmatpush1.bf16.msra.mxu0 0
    %106 = vmatprep.subr.bf16.mxu0 0
    %107 = vmatpush1.bf16.msra.mxu0 0
    %108 = vmatprep.subr.bf16.mxu0 0
    %109 = vmatpush1.bf16.msra.mxu0 0
    %110 = vmatprep.subr.bf16.mxu0 0
    %111 = vmatpush1.bf16.msra.mxu0 0
    %112 = vmatprep.subr.bf16.mxu0 0
    %113 = vmatpush1.bf16.msra.mxu0 0
    %114 = vmatprep.subr.bf16.mxu0 0
    %115 = vmatpush1.bf16.msra.mxu0 0
    %116 = vmatprep.subr.bf16.mxu0 0
    %117 = vmatpush1.bf16.msra.mxu0 0
    %118 = vmatprep.subr.bf16.mxu0 0
    %119 = vmatpush1.bf16.msra.mxu0 %v102
    %120 = vmatprep.subr.bf16.mxu0 0
    %121 = vmatpush2.bf16.msra.mxu0 0
    %122 = vmatprep.subr.bf16.mxu0 0
    %123 = vmatpush2.bf16.msra.mxu0 0
    %124 = vmatprep.subr.bf16.mxu0 0
    %125 = vmatpush2.bf16.msra.mxu0 0
    %126 = vmatprep.subr.bf16.mxu0 0
    %127 = vmatpush2.bf16.msra.mxu0 0
    %128 = vmatprep.subr.bf16.mxu0 0
    %129 = vmatpush2.bf16.msra.mxu0 0
    %130 = vmatprep.subr.bf16.mxu0 0
    %131 = vmatpush2.bf16.msra.mxu0 0
    %132 = vmatprep.subr.bf16.mxu0 0
    %133 = vmatpush2.bf16.msra.mxu0 0
    %134 = vmatprep.subr.bf16.mxu0 0
    %135 = vmatpush2.bf16.msra.mxu0 0
    %136 = vmatprep.mubr.bf16.mxu0 0
    %137 = vmatmul.mubr.bf16.gmra.mxu0 %v98
    %v138 = vpop.f32.mrf.mxu0
    %v139 = vadd.f32 0.0, %v138
    %v140 = vpop.f32.mrf.mxu0
    %v141 = vpop.f32.mrf.mxu0
    %v142 = vadd.f32 0.0, %v141
    %v143 = vpop.f32.mrf.mxu0
    %144 = vdwg.mxu0
    %v149 = vunpack.c.l.b16 %v24
    %v150 = vunpack.c.l.b16 %v25
    %v151 = vunpack.c.l.b16 %v26
    %v152 = vunpack.c.l.b16 %v27
    %v153 = vpack.c.b16 %v150, %v149
    %v154 = vpack.c.b16 %v152, %v151
    %157 = vmatprep.subr.bf16.mxu0 0
    %158 = vmatpush1.bf16.msra.mxu0 0
    %159 = vmatprep.subr.bf16.mxu0 0
    %160 = vmatpush1.bf16.msra.mxu0 0
    %161 = vmatprep.subr.bf16.mxu0 0
    %162 = vmatpush1.bf16.msra.mxu0 0
    %163 = vmatprep.subr.bf16.mxu0 0
    %164 = vmatpush1.bf16.msra.mxu0 0
    %165 = vmatprep.subr.bf16.mxu0 0
    %166 = vmatpush1.bf16.msra.mxu0 0
    %167 = vmatprep.subr.bf16.mxu0 0
    %168 = vmatpush1.bf16.msra.mxu0 0
    %169 = vmatprep.subr.bf16.mxu0 0
    %170 = vmatpush1.bf16.msra.mxu0 %v154
    %171 = vmatprep.subr.bf16.mxu0 0
    %172 = vmatpush1.bf16.msra.mxu0 %v153
    %173 = vmatprep.subr.bf16.mxu0 0
    %174 = vmatpush2.bf16.msra.mxu0 0
    %175 = vmatprep.subr.bf16.mxu0 0
    %176 = vmatpush2.bf16.msra.mxu0 0
    %177 = vmatprep.subr.bf16.mxu0 0
    %178 = vmatpush2.bf16.msra.mxu0 0
    %179 = vmatprep.subr.bf16.mxu0 0
    %180 = vmatpush2.bf16.msra.mxu0 0
    %181 = vmatprep.subr.bf16.mxu0 0
    %182 = vmatpush2.bf16.msra.mxu0 0
    %183 = vmatprep.subr.bf16.mxu0 0
    %184 = vmatpush2.bf16.msra.mxu0 0
    %185 = vmatprep.subr.bf16.mxu0 0
    %186 = vmatpush2.bf16.msra.mxu0 0
    %187 = vmatprep.subr.bf16.mxu0 0
    %188 = vmatpush2.bf16.msra.mxu0 0
    %189 = vmatprep.mubr.bf16.mxu0 0
    %190 = vmatmul.mubr.bf16.gmra.mxu0 %v51
    %v191 = vpop.f32.mrf.mxu0
    %v192 = vadd.f32 %v139, %v191
    %v193 = vpop.f32.mrf.mxu0
    %v194 = vpop.f32.mrf.mxu0
    %v195 = vadd.f32 %v142, %v194
    %v196 = vpop.f32.mrf.mxu0
    %197 = vdwg.mxu0
    %v198 = vld [vmem:[%s2] sm:$0x1]
    %v200 = vlaneseq
    %v201 = vshrl.u32 %v200, 7
    %v202 = vsub.s32 0, %v201
    %v203 = vrot.slane %v198, %v202
    %v205 = vadd.f32 %v192, %v203
    %v206 = vadd.f32 %v195, %v203
    %207 = vst.msk [vmem:[#allocation2] sm:$0xff] %vm49, %v205
    %208 = vst.msk [vmem:[#allocation2 + $0x8] sm:$0xff] %vm49, %v206
    // Predicated region
    $region22: #{ace_layer_forward.1} parent=1 // pred_check
      _
    $region23: #{ace_layer_forward.1} parent=1 // pred_check_branch
      %210 = sbr.rel (0) target = $region25
    $region24: #{ace_layer_forward.1} parent=1 // pred_region
      %s212 = ssub.s32 256, 256
      %213 = vsyncadd [#allocation3], %s212
      %s214 = sshll.u32 [#allocation2], 4
      %s215 = int_to_ptr.vmem [resolvable:$true] %s214
      %220 = dma.vmem_to_hbm [thread:$0]  %s215, 256, %s5, [#allocation3], 128, 128, 8
    $region25: #{ace_layer_forward.1} parent=1 // pred_fallthru
      _
    // Predicated region
    $region26: #{ace_layer_forward.1} parent=1 // pred_check
      _
    $region27: #{ace_layer_forward.1} parent=1 // pred_check_branch
      %222 = sbr.rel (0) target = $region29
    $region28: #{ace_layer_forward.1} parent=1 // pred_region
      %223 = dma.done [#allocation3], 256
    $region29: #{ace_layer_forward.1} parent=1 // pred_fallthru
      _
    %224 = vsyncpa [#allocation3], 1

</llo_original>
